<compile_context>
chip_gen: v7x
topology: tpu7x:2x2x1
jax: 0.10.0
libtpu: 0.0.40
codegen_flags: <defaults>
</compile_context>

<pallas_src>
import functools

import jax
import jax.numpy as jnp
from jax import lax
from jax.experimental import pallas as pl
from jax.experimental.pallas import tpu as pltpu

INPUT_SIZE = 3
HIDDEN_SIZE = 6
OUTPUT_SIZE = 2

_LANES = 128
_SUBLANES = 8
_CHUNK_M = 8          # sublane-blocks processed per inner-loop iteration
_MAX_M_TILE = 1024    # sublane-blocks per grid step -> 128K examples / step


def _affine_chunk(rows, w_ref, b_ref, n_in, n_out, relu):
    """out[j] = act(b[j] + sum_i w[i*n_out+j] * rows[i]); rows are (chunk,128) tiles."""
    out = []
    for j in range(n_out):
        acc = rows[0] * w_ref[0 * n_out + j]
        for i in range(1, n_in):
            acc = acc + rows[i] * w_ref[i * n_out + j]
        acc = acc + b_ref[j]
        if relu:
            acc = jnp.maximum(acc, 0.0)
        out.append(acc)
    return out


def mlp_kernel(w1_ref, b1_ref, w2_ref, b2_ref, w3_ref, b3_ref, x_ref, o_ref):
    # x_ref: (INPUT_SIZE, m_tile, 128) VMEM block; batch on the dense last axes.
    m_tile = x_ref.shape[1]
    n_chunks = m_tile // _CHUNK_M

    def body(step, carry):
        off = pl.multiple_of(step * _CHUNK_M, _CHUNK_M)
        x_rows = [x_ref[i, pl.ds(off, _CHUNK_M), :] for i in range(INPUT_SIZE)]

        h1 = _affine_chunk(x_rows, w1_ref, b1_ref, INPUT_SIZE, HIDDEN_SIZE, True)
        h2 = _affine_chunk(h1, w2_ref, b2_ref, HIDDEN_SIZE, HIDDEN_SIZE, True)
        logits = _affine_chunk(h2, w3_ref, b3_ref, HIDDEN_SIZE, OUTPUT_SIZE, False)

        # Exact, numerically stable 2-class softmax (sigmoid form).
        d = logits[1] - logits[0]
        p0 = 1.0 / (1.0 + jnp.exp(d))
        p1 = 1.0 - p0

        # Store rows directly; no stacked temporary.
        o_ref[0, pl.ds(off, _CHUNK_M), :] = p0
        o_ref[1, pl.ds(off, _CHUNK_M), :] = p1
        return carry

    lax.fori_loop(0, n_chunks, body, 0)


def _round_up(x, m):
    return ((x + m - 1) // m) * m


@functools.partial(jax.jit, static_argnames=("max_m_tile",))
def mlp_forward(x, params, *, max_m_tile=_MAX_M_TILE):
    """x: (B, INPUT_SIZE) f32 -> (B, OUTPUT_SIZE) softmax probabilities."""
    w1, b1, w2, b2, w3, b3 = params
    B = x.shape[0]

    # Pad the batch only to a whole (8,128) f32 vreg; waste <= 1023 examples.
    b_pad = _round_up(B, _SUBLANES * _LANES)
    m = b_pad // _LANES                      # total sublane-blocks
    m_tile = min(max_m_tile, m)              # both multiples of 8
    grid = pl.cdiv(m, m_tile)                # last block may be partial

    # One fused pad+transpose into the lane-dense feature-major layout.
    xt = jnp.pad(x.T.astype(jnp.float32), ((0, 0), (0, b_pad - B)))
    x3 = xt.reshape(INPUT_SIZE, m, _LANES)

    smem = pl.BlockSpec(memory_space=pltpu.MemorySpace.SMEM)

    o3 = pl.pallas_call(
        mlp_kernel,
        out_shape=jax.ShapeDtypeStruct((OUTPUT_SIZE, m, _LANES), jnp.float32),
        grid=(grid,),
        in_specs=[smem] * 6
        + [pl.BlockSpec((INPUT_SIZE, m_tile, _LANES), lambda i: (0, i, 0))],
        out_specs=pl.BlockSpec((OUTPUT_SIZE, m_tile, _LANES), lambda i: (0, i, 0)),
        compiler_params=pltpu.CompilerParams(
            dimension_semantics=("parallel",),  # v7x: shard batch over both TCs
        ),
    )(w1.reshape(-1), b1, w2.reshape(-1), b2, w3.reshape(-1), b3, x3)

    # Back to PyTorch layout: (B, OUTPUT_SIZE), drop batch padding.
    return o3.reshape(OUTPUT_SIZE, b_pad)[:, :B].T


def init_params(key):
    # torch.nn.Linear-style init; weights stored as [in_features, out_features].
    def linear(k, fan_in, fan_out):
        kw, kb = jax.random.split(k)
        bound = 1.0 / jnp.sqrt(fan_in)
        w = jax.random.uniform(kw, (fan_in, fan_out), jnp.float32, -bound, bound)
        b = jax.random.uniform(kb, (fan_out,), jnp.float32, -bound, bound)
        return w, b

    k1, k2, k3 = jax.random.split(key, 3)
    w1, b1 = linear(k1, INPUT_SIZE, HIDDEN_SIZE)
    w2, b2 = linear(k2, HIDDEN_SIZE, HIDDEN_SIZE)
    w3, b3 = linear(k3, HIDDEN_SIZE, OUTPUT_SIZE)
    return w1, b1, w2, b2, w3, b3


def mlp_reference(x, params):
    w1, b1, w2, b2, w3, b3 = params
    h1 = jnp.maximum(x @ w1 + b1, 0.0)
    h2 = jnp.maximum(h1 @ w2 + b2, 0.0)
    return jax.nn.softmax(h2 @ w3 + b3, axis=1)


if __name__ == "__main__":
    key = jax.random.PRNGKey(0)
    k_params, k_x, k_x2 = jax.random.split(key, 3)

    params = init_params(k_params)

    # Small demo batch (matches the PyTorch module's expected usage).
    x = jax.random.normal(k_x, (8, INPUT_SIZE), jnp.float32)
    out = jax.block_until_ready(mlp_forward(x, params))
    ref = mlp_reference(x, params)
    assert out.shape == (8, OUTPUT_SIZE)
    assert jnp.allclose(out, ref, atol=1e-4, rtol=1e-4), float(
        jnp.max(jnp.abs(out - ref))
    )
    assert jnp.allclose(jnp.sum(out, axis=1), 1.0, atol=1e-5)

    # Exercise the multi-block grid + partial last block path (small tile cap).
    x2 = jax.random.normal(k_x2, (2500, INPUT_SIZE), jnp.float32)
    out2 = jax.block_until_ready(mlp_forward(x2, params, max_m_tile=16))
    ref2 = mlp_reference(x2, params)
    assert out2.shape == (2500, OUTPUT_SIZE)
    assert jnp.allclose(out2, ref2, atol=1e-4, rtol=1e-4), float(
        jnp.max(jnp.abs(out2 - ref2))
    )
    assert jnp.allclose(jnp.sum(out2, axis=1), 1.0, atol=1e-5)

    print("KERNEL_OK")
</pallas_src>

<mosaic_0001>
module attributes {stable_mosaic.version = 11 : i64} {
  func.func @mlp_kernel(%arg0: i32, %arg1: memref<18xf32, #tpu.memory_space<smem>>, %arg2: memref<6xf32, #tpu.memory_space<smem>>, %arg3: memref<36xf32, #tpu.memory_space<smem>>, %arg4: memref<6xf32, #tpu.memory_space<smem>>, %arg5: memref<12xf32, #tpu.memory_space<smem>>, %arg6: memref<2xf32, #tpu.memory_space<smem>>, %arg7: memref<3x8x128xf32, #tpu.memory_space<vmem>>, %arg8: memref<2x8x128xf32, #tpu.memory_space<vmem>>) attributes {dimension_semantics = [#tpu.dimension_semantics<parallel>], iteration_bounds = array<i64: 1>, scalar_prefetch = 0 : i64, scratch_operands = 0 : i64, tpu.core_type = #tpu.core_type<tc>, window_params = [{transform_indices = @transform_0, window_bounds = array<i64: 18>}, {transform_indices = @transform_1, window_bounds = array<i64: 6>}, {transform_indices = @transform_2, window_bounds = array<i64: 36>}, {transform_indices = @transform_3, window_bounds = array<i64: 6>}, {transform_indices = @transform_4, window_bounds = array<i64: 12>}, {transform_indices = @transform_5, window_bounds = array<i64: 2>}, {transform_indices = @transform_6, window_bounds = array<i64: 3, 8, 128>}, {transform_indices = @transform_7, window_bounds = array<i64: 2, 8, 128>}]} {
    %c0_i32 = arith.constant 0 : i32
    %c8_i32 = arith.constant 8 : i32
    %0 = arith.muli %c0_i32, %c8_i32 : i32
    %1 = tpu.assume_multiple %0, 8 : i32
    %c0 = arith.constant 0 : index
    %2 = arith.index_cast %1 : i32 to index
    %c0_0 = arith.constant 0 : index
    %3 = vector.load %arg7[%c0, %2, %c0_0] : memref<3x8x128xf32, #tpu.memory_space<vmem>>, vector<1x8x128xf32>
    %4 = vector.shape_cast %3 : vector<1x8x128xf32> to vector<8x128xf32>
    %c1 = arith.constant 1 : index
    %5 = arith.index_cast %1 : i32 to index
    %c0_1 = arith.constant 0 : index
    %6 = vector.load %arg7[%c1, %5, %c0_1] : memref<3x8x128xf32, #tpu.memory_space<vmem>>, vector<1x8x128xf32>
    %7 = vector.shape_cast %6 : vector<1x8x128xf32> to vector<8x128xf32>
    %c2 = arith.constant 2 : index
    %8 = arith.index_cast %1 : i32 to index
    %c0_2 = arith.constant 0 : index
    %9 = vector.load %arg7[%c2, %8, %c0_2] : memref<3x8x128xf32, #tpu.memory_space<vmem>>, vector<1x8x128xf32>
    %10 = vector.shape_cast %9 : vector<1x8x128xf32> to vector<8x128xf32>
    %c0_3 = arith.constant 0 : index
    %11 = memref.load %arg1[%c0_3] : memref<18xf32, #tpu.memory_space<smem>>
    %12 = vector.broadcast %11 : f32 to vector<8x128xf32>
    %13 = arith.mulf %4, %12 : vector<8x128xf32>
    %c6 = arith.constant 6 : index
    %14 = memref.load %arg1[%c6] : memref<18xf32, #tpu.memory_space<smem>>
    %15 = vector.broadcast %14 : f32 to vector<8x128xf32>
    %16 = arith.mulf %7, %15 : vector<8x128xf32>
    %17 = arith.addf %13, %16 : vector<8x128xf32>
    %c12 = arith.constant 12 : index
    %18 = memref.load %arg1[%c12] : memref<18xf32, #tpu.memory_space<smem>>
    %19 = vector.broadcast %18 : f32 to vector<8x128xf32>
    %20 = arith.mulf %10, %19 : vector<8x128xf32>
    %21 = arith.addf %17, %20 : vector<8x128xf32>
    %c0_4 = arith.constant 0 : index
    %22 = memref.load %arg2[%c0_4] : memref<6xf32, #tpu.memory_space<smem>>
    %23 = vector.broadcast %22 : f32 to vector<8x128xf32>
    %24 = arith.addf %21, %23 : vector<8x128xf32>
    %cst = arith.constant 0.000000e+00 : f32
    %25 = vector.broadcast %cst : f32 to vector<8x128xf32>
    %26 = arith.maximumf %24, %25 : vector<8x128xf32>
    %c1_5 = arith.constant 1 : index
    %27 = memref.load %arg1[%c1_5] : memref<18xf32, #tpu.memory_space<smem>>
    %28 = vector.broadcast %27 : f32 to vector<8x128xf32>
    %29 = arith.mulf %4, %28 : vector<8x128xf32>
    %c7 = arith.constant 7 : index
    %30 = memref.load %arg1[%c7] : memref<18xf32, #tpu.memory_space<smem>>
    %31 = vector.broadcast %30 : f32 to vector<8x128xf32>
    %32 = arith.mulf %7, %31 : vector<8x128xf32>
    %33 = arith.addf %29, %32 : vector<8x128xf32>
    %c13 = arith.constant 13 : index
    %34 = memref.load %arg1[%c13] : memref<18xf32, #tpu.memory_space<smem>>
    %35 = vector.broadcast %34 : f32 to vector<8x128xf32>
    %36 = arith.mulf %10, %35 : vector<8x128xf32>
    %37 = arith.addf %33, %36 : vector<8x128xf32>
    %c1_6 = arith.constant 1 : index
    %38 = memref.load %arg2[%c1_6] : memref<6xf32, #tpu.memory_space<smem>>
    %39 = vector.broadcast %38 : f32 to vector<8x128xf32>
    %40 = arith.addf %37, %39 : vector<8x128xf32>
    %cst_7 = arith.constant 0.000000e+00 : f32
    %41 = vector.broadcast %cst_7 : f32 to vector<8x128xf32>
    %42 = arith.maximumf %40, %41 : vector<8x128xf32>
    %c2_8 = arith.constant 2 : index
    %43 = memref.load %arg1[%c2_8] : memref<18xf32, #tpu.memory_space<smem>>
    %44 = vector.broadcast %43 : f32 to vector<8x128xf32>
    %45 = arith.mulf %4, %44 : vector<8x128xf32>
    %c8 = arith.constant 8 : index
    %46 = memref.load %arg1[%c8] : memref<18xf32, #tpu.memory_space<smem>>
    %47 = vector.broadcast %46 : f32 to vector<8x128xf32>
    %48 = arith.mulf %7, %47 : vector<8x128xf32>
    %49 = arith.addf %45, %48 : vector<8x128xf32>
    %c14 = arith.constant 14 : index
    %50 = memref.load %arg1[%c14] : memref<18xf32, #tpu.memory_space<smem>>
    %51 = vector.broadcast %50 : f32 to vector<8x128xf32>
    %52 = arith.mulf %10, %51 : vector<8x128xf32>
    %53 = arith.addf %49, %52 : vector<8x128xf32>
    %c2_9 = arith.constant 2 : index
    %54 = memref.load %arg2[%c2_9] : memref<6xf32, #tpu.memory_space<smem>>
    %55 = vector.broadcast %54 : f32 to vector<8x128xf32>
    %56 = arith.addf %53, %55 : vector<8x128xf32>
    %cst_10 = arith.constant 0.000000e+00 : f32
    %57 = vector.broadcast %cst_10 : f32 to vector<8x128xf32>
    %58 = arith.maximumf %56, %57 : vector<8x128xf32>
    %c3 = arith.constant 3 : index
    %59 = memref.load %arg1[%c3] : memref<18xf32, #tpu.memory_space<smem>>
    %60 = vector.broadcast %59 : f32 to vector<8x128xf32>
    %61 = arith.mulf %4, %60 : vector<8x128xf32>
    %c9 = arith.constant 9 : index
    %62 = memref.load %arg1[%c9] : memref<18xf32, #tpu.memory_space<smem>>
    %63 = vector.broadcast %62 : f32 to vector<8x128xf32>
    %64 = arith.mulf %7, %63 : vector<8x128xf32>
    %65 = arith.addf %61, %64 : vector<8x128xf32>
    %c15 = arith.constant 15 : index
    %66 = memref.load %arg1[%c15] : memref<18xf32, #tpu.memory_space<smem>>
    %67 = vector.broadcast %66 : f32 to vector<8x128xf32>
    %68 = arith.mulf %10, %67 : vector<8x128xf32>
    %69 = arith.addf %65, %68 : vector<8x128xf32>
    %c3_11 = arith.constant 3 : index
    %70 = memref.load %arg2[%c3_11] : memref<6xf32, #tpu.memory_space<smem>>
    %71 = vector.broadcast %70 : f32 to vector<8x128xf32>
    %72 = arith.addf %69, %71 : vector<8x128xf32>
    %cst_12 = arith.constant 0.000000e+00 : f32
    %73 = vector.broadcast %cst_12 : f32 to vector<8x128xf32>
    %74 = arith.maximumf %72, %73 : vector<8x128xf32>
    %c4 = arith.constant 4 : index
    %75 = memref.load %arg1[%c4] : memref<18xf32, #tpu.memory_space<smem>>
    %76 = vector.broadcast %75 : f32 to vector<8x128xf32>
    %77 = arith.mulf %4, %76 : vector<8x128xf32>
    %c10 = arith.constant 10 : index
    %78 = memref.load %arg1[%c10] : memref<18xf32, #tpu.memory_space<smem>>
    %79 = vector.broadcast %78 : f32 to vector<8x128xf32>
    %80 = arith.mulf %7, %79 : vector<8x128xf32>
    %81 = arith.addf %77, %80 : vector<8x128xf32>
    %c16 = arith.constant 16 : index
    %82 = memref.load %arg1[%c16] : memref<18xf32, #tpu.memory_space<smem>>
    %83 = vector.broadcast %82 : f32 to vector<8x128xf32>
    %84 = arith.mulf %10, %83 : vector<8x128xf32>
    %85 = arith.addf %81, %84 : vector<8x128xf32>
    %c4_13 = arith.constant 4 : index
    %86 = memref.load %arg2[%c4_13] : memref<6xf32, #tpu.memory_space<smem>>
    %87 = vector.broadcast %86 : f32 to vector<8x128xf32>
    %88 = arith.addf %85, %87 : vector<8x128xf32>
    %cst_14 = arith.constant 0.000000e+00 : f32
    %89 = vector.broadcast %cst_14 : f32 to vector<8x128xf32>
    %90 = arith.maximumf %88, %89 : vector<8x128xf32>
    %c5 = arith.constant 5 : index
    %91 = memref.load %arg1[%c5] : memref<18xf32, #tpu.memory_space<smem>>
    %92 = vector.broadcast %91 : f32 to vector<8x128xf32>
    %93 = arith.mulf %4, %92 : vector<8x128xf32>
    %c11 = arith.constant 11 : index
    %94 = memref.load %arg1[%c11] : memref<18xf32, #tpu.memory_space<smem>>
    %95 = vector.broadcast %94 : f32 to vector<8x128xf32>
    %96 = arith.mulf %7, %95 : vector<8x128xf32>
    %97 = arith.addf %93, %96 : vector<8x128xf32>
    %c17 = arith.constant 17 : index
    %98 = memref.load %arg1[%c17] : memref<18xf32, #tpu.memory_space<smem>>
    %99 = vector.broadcast %98 : f32 to vector<8x128xf32>
    %100 = arith.mulf %10, %99 : vector<8x128xf32>
    %101 = arith.addf %97, %100 : vector<8x128xf32>
    %c5_15 = arith.constant 5 : index
    %102 = memref.load %arg2[%c5_15] : memref<6xf32, #tpu.memory_space<smem>>
    %103 = vector.broadcast %102 : f32 to vector<8x128xf32>
    %104 = arith.addf %101, %103 : vector<8x128xf32>
    %cst_16 = arith.constant 0.000000e+00 : f32
    %105 = vector.broadcast %cst_16 : f32 to vector<8x128xf32>
    %106 = arith.maximumf %104, %105 : vector<8x128xf32>
    %c0_17 = arith.constant 0 : index
    %107 = memref.load %arg3[%c0_17] : memref<36xf32, #tpu.memory_space<smem>>
    %108 = vector.broadcast %107 : f32 to vector<8x128xf32>
    %109 = arith.mulf %26, %108 : vector<8x128xf32>
    %c6_18 = arith.constant 6 : index
    %110 = memref.load %arg3[%c6_18] : memref<36xf32, #tpu.memory_space<smem>>
    %111 = vector.broadcast %110 : f32 to vector<8x128xf32>
    %112 = arith.mulf %42, %111 : vector<8x128xf32>
    %113 = arith.addf %109, %112 : vector<8x128xf32>
    %c12_19 = arith.constant 12 : index
    %114 = memref.load %arg3[%c12_19] : memref<36xf32, #tpu.memory_space<smem>>
    %115 = vector.broadcast %114 : f32 to vector<8x128xf32>
    %116 = arith.mulf %58, %115 : vector<8x128xf32>
    %117 = arith.addf %113, %116 : vector<8x128xf32>
    %c18 = arith.constant 18 : index
    %118 = memref.load %arg3[%c18] : memref<36xf32, #tpu.memory_space<smem>>
    %119 = vector.broadcast %118 : f32 to vector<8x128xf32>
    %120 = arith.mulf %74, %119 : vector<8x128xf32>
    %121 = arith.addf %117, %120 : vector<8x128xf32>
    %c24 = arith.constant 24 : index
    %122 = memref.load %arg3[%c24] : memref<36xf32, #tpu.memory_space<smem>>
    %123 = vector.broadcast %122 : f32 to vector<8x128xf32>
    %124 = arith.mulf %90, %123 : vector<8x128xf32>
    %125 = arith.addf %121, %124 : vector<8x128xf32>
    %c30 = arith.constant 30 : index
    %126 = memref.load %arg3[%c30] : memref<36xf32, #tpu.memory_space<smem>>
    %127 = vector.broadcast %126 : f32 to vector<8x128xf32>
    %128 = arith.mulf %106, %127 : vector<8x128xf32>
    %129 = arith.addf %125, %128 : vector<8x128xf32>
    %c0_20 = arith.constant 0 : index
    %130 = memref.load %arg4[%c0_20] : memref<6xf32, #tpu.memory_space<smem>>
    %131 = vector.broadcast %130 : f32 to vector<8x128xf32>
    %132 = arith.addf %129, %131 : vector<8x128xf32>
    %cst_21 = arith.constant 0.000000e+00 : f32
    %133 = vector.broadcast %cst_21 : f32 to vector<8x128xf32>
    %134 = arith.maximumf %132, %133 : vector<8x128xf32>
    %c1_22 = arith.constant 1 : index
    %135 = memref.load %arg3[%c1_22] : memref<36xf32, #tpu.memory_space<smem>>
    %136 = vector.broadcast %135 : f32 to vector<8x128xf32>
    %137 = arith.mulf %26, %136 : vector<8x128xf32>
    %c7_23 = arith.constant 7 : index
    %138 = memref.load %arg3[%c7_23] : memref<36xf32, #tpu.memory_space<smem>>
    %139 = vector.broadcast %138 : f32 to vector<8x128xf32>
    %140 = arith.mulf %42, %139 : vector<8x128xf32>
    %141 = arith.addf %137, %140 : vector<8x128xf32>
    %c13_24 = arith.constant 13 : index
    %142 = memref.load %arg3[%c13_24] : memref<36xf32, #tpu.memory_space<smem>>
    %143 = vector.broadcast %142 : f32 to vector<8x128xf32>
    %144 = arith.mulf %58, %143 : vector<8x128xf32>
    %145 = arith.addf %141, %144 : vector<8x128xf32>
    %c19 = arith.constant 19 : index
    %146 = memref.load %arg3[%c19] : memref<36xf32, #tpu.memory_space<smem>>
    %147 = vector.broadcast %146 : f32 to vector<8x128xf32>
    %148 = arith.mulf %74, %147 : vector<8x128xf32>
    %149 = arith.addf %145, %148 : vector<8x128xf32>
    %c25 = arith.constant 25 : index
    %150 = memref.load %arg3[%c25] : memref<36xf32, #tpu.memory_space<smem>>
    %151 = vector.broadcast %150 : f32 to vector<8x128xf32>
    %152 = arith.mulf %90, %151 : vector<8x128xf32>
    %153 = arith.addf %149, %152 : vector<8x128xf32>
    %c31 = arith.constant 31 : index
    %154 = memref.load %arg3[%c31] : memref<36xf32, #tpu.memory_space<smem>>
    %155 = vector.broadcast %154 : f32 to vector<8x128xf32>
    %156 = arith.mulf %106, %155 : vector<8x128xf32>
    %157 = arith.addf %153, %156 : vector<8x128xf32>
    %c1_25 = arith.constant 1 : index
    %158 = memref.load %arg4[%c1_25] : memref<6xf32, #tpu.memory_space<smem>>
    %159 = vector.broadcast %158 : f32 to vector<8x128xf32>
    %160 = arith.addf %157, %159 : vector<8x128xf32>
    %cst_26 = arith.constant 0.000000e+00 : f32
    %161 = vector.broadcast %cst_26 : f32 to vector<8x128xf32>
    %162 = arith.maximumf %160, %161 : vector<8x128xf32>
    %c2_27 = arith.constant 2 : index
    %163 = memref.load %arg3[%c2_27] : memref<36xf32, #tpu.memory_space<smem>>
    %164 = vector.broadcast %163 : f32 to vector<8x128xf32>
    %165 = arith.mulf %26, %164 : vector<8x128xf32>
    %c8_28 = arith.constant 8 : index
    %166 = memref.load %arg3[%c8_28] : memref<36xf32, #tpu.memory_space<smem>>
    %167 = vector.broadcast %166 : f32 to vector<8x128xf32>
    %168 = arith.mulf %42, %167 : vector<8x128xf32>
    %169 = arith.addf %165, %168 : vector<8x128xf32>
    %c14_29 = arith.constant 14 : index
    %170 = memref.load %arg3[%c14_29] : memref<36xf32, #tpu.memory_space<smem>>
    %171 = vector.broadcast %170 : f32 to vector<8x128xf32>
    %172 = arith.mulf %58, %171 : vector<8x128xf32>
    %173 = arith.addf %169, %172 : vector<8x128xf32>
    %c20 = arith.constant 20 : index
    %174 = memref.load %arg3[%c20] : memref<36xf32, #tpu.memory_space<smem>>
    %175 = vector.broadcast %174 : f32 to vector<8x128xf32>
    %176 = arith.mulf %74, %175 : vector<8x128xf32>
    %177 = arith.addf %173, %176 : vector<8x128xf32>
    %c26 = arith.constant 26 : index
    %178 = memref.load %arg3[%c26] : memref<36xf32, #tpu.memory_space<smem>>
    %179 = vector.broadcast %178 : f32 to vector<8x128xf32>
    %180 = arith.mulf %90, %179 : vector<8x128xf32>
    %181 = arith.addf %177, %180 : vector<8x128xf32>
    %c32 = arith.constant 32 : index
    %182 = memref.load %arg3[%c32] : memref<36xf32, #tpu.memory_space<smem>>
    %183 = vector.broadcast %182 : f32 to vector<8x128xf32>
    %184 = arith.mulf %106, %183 : vector<8x128xf32>
    %185 = arith.addf %181, %184 : vector<8x128xf32>
    %c2_30 = arith.constant 2 : index
    %186 = memref.load %arg4[%c2_30] : memref<6xf32, #tpu.memory_space<smem>>
    %187 = vector.broadcast %186 : f32 to vector<8x128xf32>
    %188 = arith.addf %185, %187 : vector<8x128xf32>
    %cst_31 = arith.constant 0.000000e+00 : f32
    %189 = vector.broadcast %cst_31 : f32 to vector<8x128xf32>
    %190 = arith.maximumf %188, %189 : vector<8x128xf32>
    %c3_32 = arith.constant 3 : index
    %191 = memref.load %arg3[%c3_32] : memref<36xf32, #tpu.memory_space<smem>>
    %192 = vector.broadcast %191 : f32 to vector<8x128xf32>
    %193 = arith.mulf %26, %192 : vector<8x128xf32>
    %c9_33 = arith.constant 9 : index
    %194 = memref.load %arg3[%c9_33] : memref<36xf32, #tpu.memory_space<smem>>
    %195 = vector.broadcast %194 : f32 to vector<8x128xf32>
    %196 = arith.mulf %42, %195 : vector<8x128xf32>
    %197 = arith.addf %193, %196 : vector<8x128xf32>
    %c15_34 = arith.constant 15 : index
    %198 = memref.load %arg3[%c15_34] : memref<36xf32, #tpu.memory_space<smem>>
    %199 = vector.broadcast %198 : f32 to vector<8x128xf32>
    %200 = arith.mulf %58, %199 : vector<8x128xf32>
    %201 = arith.addf %197, %200 : vector<8x128xf32>
    %c21 = arith.constant 21 : index
    %202 = memref.load %arg3[%c21] : memref<36xf32, #tpu.memory_space<smem>>
    %203 = vector.broadcast %202 : f32 to vector<8x128xf32>
    %204 = arith.mulf %74, %203 : vector<8x128xf32>
    %205 = arith.addf %201, %204 : vector<8x128xf32>
    %c27 = arith.constant 27 : index
    %206 = memref.load %arg3[%c27] : memref<36xf32, #tpu.memory_space<smem>>
    %207 = vector.broadcast %206 : f32 to vector<8x128xf32>
    %208 = arith.mulf %90, %207 : vector<8x128xf32>
    %209 = arith.addf %205, %208 : vector<8x128xf32>
    %c33 = arith.constant 33 : index
    %210 = memref.load %arg3[%c33] : memref<36xf32, #tpu.memory_space<smem>>
    %211 = vector.broadcast %210 : f32 to vector<8x128xf32>
    %212 = arith.mulf %106, %211 : vector<8x128xf32>
    %213 = arith.addf %209, %212 : vector<8x128xf32>
    %c3_35 = arith.constant 3 : index
    %214 = memref.load %arg4[%c3_35] : memref<6xf32, #tpu.memory_space<smem>>
    %215 = vector.broadcast %214 : f32 to vector<8x128xf32>
    %216 = arith.addf %213, %215 : vector<8x128xf32>
    %cst_36 = arith.constant 0.000000e+00 : f32
    %217 = vector.broadcast %cst_36 : f32 to vector<8x128xf32>
    %218 = arith.maximumf %216, %217 : vector<8x128xf32>
    %c4_37 = arith.constant 4 : index
    %219 = memref.load %arg3[%c4_37] : memref<36xf32, #tpu.memory_space<smem>>
    %220 = vector.broadcast %219 : f32 to vector<8x128xf32>
    %221 = arith.mulf %26, %220 : vector<8x128xf32>
    %c10_38 = arith.constant 10 : index
    %222 = memref.load %arg3[%c10_38] : memref<36xf32, #tpu.memory_space<smem>>
    %223 = vector.broadcast %222 : f32 to vector<8x128xf32>
    %224 = arith.mulf %42, %223 : vector<8x128xf32>
    %225 = arith.addf %221, %224 : vector<8x128xf32>
    %c16_39 = arith.constant 16 : index
    %226 = memref.load %arg3[%c16_39] : memref<36xf32, #tpu.memory_space<smem>>
    %227 = vector.broadcast %226 : f32 to vector<8x128xf32>
    %228 = arith.mulf %58, %227 : vector<8x128xf32>
    %229 = arith.addf %225, %228 : vector<8x128xf32>
    %c22 = arith.constant 22 : index
    %230 = memref.load %arg3[%c22] : memref<36xf32, #tpu.memory_space<smem>>
    %231 = vector.broadcast %230 : f32 to vector<8x128xf32>
    %232 = arith.mulf %74, %231 : vector<8x128xf32>
    %233 = arith.addf %229, %232 : vector<8x128xf32>
    %c28 = arith.constant 28 : index
    %234 = memref.load %arg3[%c28] : memref<36xf32, #tpu.memory_space<smem>>
    %235 = vector.broadcast %234 : f32 to vector<8x128xf32>
    %236 = arith.mulf %90, %235 : vector<8x128xf32>
    %237 = arith.addf %233, %236 : vector<8x128xf32>
    %c34 = arith.constant 34 : index
    %238 = memref.load %arg3[%c34] : memref<36xf32, #tpu.memory_space<smem>>
    %239 = vector.broadcast %238 : f32 to vector<8x128xf32>
    %240 = arith.mulf %106, %239 : vector<8x128xf32>
    %241 = arith.addf %237, %240 : vector<8x128xf32>
    %c4_40 = arith.constant 4 : index
    %242 = memref.load %arg4[%c4_40] : memref<6xf32, #tpu.memory_space<smem>>
    %243 = vector.broadcast %242 : f32 to vector<8x128xf32>
    %244 = arith.addf %241, %243 : vector<8x128xf32>
    %cst_41 = arith.constant 0.000000e+00 : f32
    %245 = vector.broadcast %cst_41 : f32 to vector<8x128xf32>
    %246 = arith.maximumf %244, %245 : vector<8x128xf32>
    %c5_42 = arith.constant 5 : index
    %247 = memref.load %arg3[%c5_42] : memref<36xf32, #tpu.memory_space<smem>>
    %248 = vector.broadcast %247 : f32 to vector<8x128xf32>
    %249 = arith.mulf %26, %248 : vector<8x128xf32>
    %c11_43 = arith.constant 11 : index
    %250 = memref.load %arg3[%c11_43] : memref<36xf32, #tpu.memory_space<smem>>
    %251 = vector.broadcast %250 : f32 to vector<8x128xf32>
    %252 = arith.mulf %42, %251 : vector<8x128xf32>
    %253 = arith.addf %249, %252 : vector<8x128xf32>
    %c17_44 = arith.constant 17 : index
    %254 = memref.load %arg3[%c17_44] : memref<36xf32, #tpu.memory_space<smem>>
    %255 = vector.broadcast %254 : f32 to vector<8x128xf32>
    %256 = arith.mulf %58, %255 : vector<8x128xf32>
    %257 = arith.addf %253, %256 : vector<8x128xf32>
    %c23 = arith.constant 23 : index
    %258 = memref.load %arg3[%c23] : memref<36xf32, #tpu.memory_space<smem>>
    %259 = vector.broadcast %258 : f32 to vector<8x128xf32>
    %260 = arith.mulf %74, %259 : vector<8x128xf32>
    %261 = arith.addf %257, %260 : vector<8x128xf32>
    %c29 = arith.constant 29 : index
    %262 = memref.load %arg3[%c29] : memref<36xf32, #tpu.memory_space<smem>>
    %263 = vector.broadcast %262 : f32 to vector<8x128xf32>
    %264 = arith.mulf %90, %263 : vector<8x128xf32>
    %265 = arith.addf %261, %264 : vector<8x128xf32>
    %c35 = arith.constant 35 : index
    %266 = memref.load %arg3[%c35] : memref<36xf32, #tpu.memory_space<smem>>
    %267 = vector.broadcast %266 : f32 to vector<8x128xf32>
    %268 = arith.mulf %106, %267 : vector<8x128xf32>
    %269 = arith.addf %265, %268 : vector<8x128xf32>
    %c5_45 = arith.constant 5 : index
    %270 = memref.load %arg4[%c5_45] : memref<6xf32, #tpu.memory_space<smem>>
    %271 = vector.broadcast %270 : f32 to vector<8x128xf32>
    %272 = arith.addf %269, %271 : vector<8x128xf32>
    %cst_46 = arith.constant 0.000000e+00 : f32
    %273 = vector.broadcast %cst_46 : f32 to vector<8x128xf32>
    %274 = arith.maximumf %272, %273 : vector<8x128xf32>
    %c0_47 = arith.constant 0 : index
    %275 = memref.load %arg5[%c0_47] : memref<12xf32, #tpu.memory_space<smem>>
    %276 = vector.broadcast %275 : f32 to vector<8x128xf32>
    %277 = arith.mulf %134, %276 : vector<8x128xf32>
    %c2_48 = arith.constant 2 : index
    %278 = memref.load %arg5[%c2_48] : memref<12xf32, #tpu.memory_space<smem>>
    %279 = vector.broadcast %278 : f32 to vector<8x128xf32>
    %280 = arith.mulf %162, %279 : vector<8x128xf32>
    %281 = arith.addf %277, %280 : vector<8x128xf32>
    %c4_49 = arith.constant 4 : index
    %282 = memref.load %arg5[%c4_49] : memref<12xf32, #tpu.memory_space<smem>>
    %283 = vector.broadcast %282 : f32 to vector<8x128xf32>
    %284 = arith.mulf %190, %283 : vector<8x128xf32>
    %285 = arith.addf %281, %284 : vector<8x128xf32>
    %c6_50 = arith.constant 6 : index
    %286 = memref.load %arg5[%c6_50] : memref<12xf32, #tpu.memory_space<smem>>
    %287 = vector.broadcast %286 : f32 to vector<8x128xf32>
    %288 = arith.mulf %218, %287 : vector<8x128xf32>
    %289 = arith.addf %285, %288 : vector<8x128xf32>
    %c8_51 = arith.constant 8 : index
    %290 = memref.load %arg5[%c8_51] : memref<12xf32, #tpu.memory_space<smem>>
    %291 = vector.broadcast %290 : f32 to vector<8x128xf32>
    %292 = arith.mulf %246, %291 : vector<8x128xf32>
    %293 = arith.addf %289, %292 : vector<8x128xf32>
    %c10_52 = arith.constant 10 : index
    %294 = memref.load %arg5[%c10_52] : memref<12xf32, #tpu.memory_space<smem>>
    %295 = vector.broadcast %294 : f32 to vector<8x128xf32>
    %296 = arith.mulf %274, %295 : vector<8x128xf32>
    %297 = arith.addf %293, %296 : vector<8x128xf32>
    %c0_53 = arith.constant 0 : index
    %298 = memref.load %arg6[%c0_53] : memref<2xf32, #tpu.memory_space<smem>>
    %299 = vector.broadcast %298 : f32 to vector<8x128xf32>
    %300 = arith.addf %297, %299 : vector<8x128xf32>
    %c1_54 = arith.constant 1 : index
    %301 = memref.load %arg5[%c1_54] : memref<12xf32, #tpu.memory_space<smem>>
    %302 = vector.broadcast %301 : f32 to vector<8x128xf32>
    %303 = arith.mulf %134, %302 : vector<8x128xf32>
    %c3_55 = arith.constant 3 : index
    %304 = memref.load %arg5[%c3_55] : memref<12xf32, #tpu.memory_space<smem>>
    %305 = vector.broadcast %304 : f32 to vector<8x128xf32>
    %306 = arith.mulf %162, %305 : vector<8x128xf32>
    %307 = arith.addf %303, %306 : vector<8x128xf32>
    %c5_56 = arith.constant 5 : index
    %308 = memref.load %arg5[%c5_56] : memref<12xf32, #tpu.memory_space<smem>>
    %309 = vector.broadcast %308 : f32 to vector<8x128xf32>
    %310 = arith.mulf %190, %309 : vector<8x128xf32>
    %311 = arith.addf %307, %310 : vector<8x128xf32>
    %c7_57 = arith.constant 7 : index
    %312 = memref.load %arg5[%c7_57] : memref<12xf32, #tpu.memory_space<smem>>
    %313 = vector.broadcast %312 : f32 to vector<8x128xf32>
    %314 = arith.mulf %218, %313 : vector<8x128xf32>
    %315 = arith.addf %311, %314 : vector<8x128xf32>
    %c9_58 = arith.constant 9 : index
    %316 = memref.load %arg5[%c9_58] : memref<12xf32, #tpu.memory_space<smem>>
    %317 = vector.broadcast %316 : f32 to vector<8x128xf32>
    %318 = arith.mulf %246, %317 : vector<8x128xf32>
    %319 = arith.addf %315, %318 : vector<8x128xf32>
    %c11_59 = arith.constant 11 : index
    %320 = memref.load %arg5[%c11_59] : memref<12xf32, #tpu.memory_space<smem>>
    %321 = vector.broadcast %320 : f32 to vector<8x128xf32>
    %322 = arith.mulf %274, %321 : vector<8x128xf32>
    %323 = arith.addf %319, %322 : vector<8x128xf32>
    %c1_60 = arith.constant 1 : index
    %324 = memref.load %arg6[%c1_60] : memref<2xf32, #tpu.memory_space<smem>>
    %325 = vector.broadcast %324 : f32 to vector<8x128xf32>
    %326 = arith.addf %323, %325 : vector<8x128xf32>
    %327 = arith.subf %326, %300 : vector<8x128xf32>
    %328 = math.exp %327 : vector<8x128xf32>
    %cst_61 = arith.constant 1.000000e+00 : f32
    %329 = vector.broadcast %cst_61 : f32 to vector<8x128xf32>
    %330 = arith.addf %329, %328 : vector<8x128xf32>
    %cst_62 = arith.constant 1.000000e+00 : f32
    %331 = vector.broadcast %cst_62 : f32 to vector<8x128xf32>
    %332 = arith.divf %331, %330 : vector<8x128xf32>
    %cst_63 = arith.constant 1.000000e+00 : f32
    %333 = vector.broadcast %cst_63 : f32 to vector<8x128xf32>
    %334 = arith.subf %333, %332 : vector<8x128xf32>
    %c0_64 = arith.constant 0 : index
    %335 = arith.index_cast %1 : i32 to index
    %c0_65 = arith.constant 0 : index
    %336 = vector.load %arg8[%c0_64, %335, %c0_65] : memref<2x8x128xf32, #tpu.memory_space<vmem>>, vector<1x8x128xf32>
    %337 = vector.shape_cast %336 : vector<1x8x128xf32> to vector<8x128xf32>
    %338 = vector.shape_cast %332 : vector<8x128xf32> to vector<1x8x128xf32>
    tpu.vector_store %arg8[%c0_64, %335, %c0_65], %338 {strides = array<i32>} : memref<2x8x128xf32, #tpu.memory_space<vmem>>, vector<1x8x128xf32>,
    %c1_66 = arith.constant 1 : index
    %339 = arith.index_cast %1 : i32 to index
    %c0_67 = arith.constant 0 : index
    %340 = vector.load %arg8[%c1_66, %339, %c0_67] : memref<2x8x128xf32, #tpu.memory_space<vmem>>, vector<1x8x128xf32>
    %341 = vector.shape_cast %340 : vector<1x8x128xf32> to vector<8x128xf32>
    %342 = vector.shape_cast %334 : vector<8x128xf32> to vector<1x8x128xf32>
    tpu.vector_store %arg8[%c1_66, %339, %c0_67], %342 {strides = array<i32>} : memref<2x8x128xf32, #tpu.memory_space<vmem>>, vector<1x8x128xf32>,
    %c1_i32 = arith.constant 1 : i32
    return
  }
  func.func @transform_0(%arg0: i32) -> i32 {
    %c0_i32 = arith.constant 0 : i32
    %c0_i32_0 = arith.constant 0 : i32
    return %c0_i32 : i32
  }
  func.func @transform_1(%arg0: i32) -> i32 {
    %c0_i32 = arith.constant 0 : i32
    %c0_i32_0 = arith.constant 0 : i32
    return %c0_i32 : i32
  }
  func.func @transform_2(%arg0: i32) -> i32 {
    %c0_i32 = arith.constant 0 : i32
    %c0_i32_0 = arith.constant 0 : i32
    return %c0_i32 : i32
  }
  func.func @transform_3(%arg0: i32) -> i32 {
    %c0_i32 = arith.constant 0 : i32
    %c0_i32_0 = arith.constant 0 : i32
    return %c0_i32 : i32
  }
  func.func @transform_4(%arg0: i32) -> i32 {
    %c0_i32 = arith.constant 0 : i32
    %c0_i32_0 = arith.constant 0 : i32
    return %c0_i32 : i32
  }
  func.func @transform_5(%arg0: i32) -> i32 {
    %c0_i32 = arith.constant 0 : i32
    %c0_i32_0 = arith.constant 0 : i32
    return %c0_i32 : i32
  }
  func.func @transform_6(%arg0: i32) -> (i32, i32, i32) {
    %c0_i32 = arith.constant 0 : i32
    %c0_i32_0 = arith.constant 0 : i32
    %c0_i32_1 = arith.constant 0 : i32
    return %c0_i32, %arg0, %c0_i32_0 : i32, i32, i32
  }
  func.func @transform_7(%arg0: i32) -> (i32, i32, i32) {
    %c0_i32 = arith.constant 0 : i32
    %c0_i32_0 = arith.constant 0 : i32
    %c0_i32_1 = arith.constant 0 : i32
    return %c0_i32, %arg0, %c0_i32_0 : i32, i32, i32
  }
}

</mosaic_0001>

<llo_original>
// kernel: mlp_forward.1
$region0: #{mlp_forward.1}
  #allocation0 [shape = 'u32[]', space=smem, size = 0x4, offset = 0x4, fixed_abs, tag = 'smem constant byte address 0x4 - core index']
  #allocation1 [shape = 'u32[144,128]{1,0:T(1,128)}', space=vmem, size = 0x12000, scoped, tag = 'internal scratch']
  %s0 = inlined_call_operand.vmem [shape: f32[18], index: 0, kind: input, shape index: {}]
  %s1 = inlined_call_operand.vmem [shape: f32[6], index: 1, kind: input, shape index: {}]
  %s2 = inlined_call_operand.vmem [shape: f32[36], index: 2, kind: input, shape index: {}]
  %s3 = inlined_call_operand.vmem [shape: f32[6], index: 3, kind: input, shape index: {}]
  %s4 = inlined_call_operand.vmem [shape: f32[12], index: 4, kind: input, shape index: {}]
  %s5 = inlined_call_operand.vmem [shape: f32[2], index: 5, kind: input, shape index: {}]
  %s6 = inlined_call_operand.vmem [shape: f32[3,8,128], index: 6, kind: input, shape index: {}]
  %s7 = inlined_call_operand.vmem [shape: f32[2,8,128], index: 7, kind: output, shape index: {}]
  %s8 = sld [smem:[#allocation0]]
  $region62: #{mlp_forward.1} parent=0
    _
  %s10 = ssub.s32 1, %s8
  %s11 = scalar_select 0, %s10, %s8
  $region1: #{mlp_forward.1} parent=0
    #allocation2 [shape = 'u8[512]{0}', space=smem, size = 0x200, scoped, tag = 'input window, operand 0, single buffered']
    #allocation3 [shape = 's32[1]{0}', space=sflag, size = 0x4, scoped, tag = 'scoped memory for mlp_forward.1']
    #allocation4 [shape = 'u8[512]{0}', space=smem, size = 0x200, scoped, tag = 'input window, operand 1, single buffered']
    #allocation5 [shape = 's32[1]{0}', space=sflag, size = 0x4, scoped, tag = 'scoped memory for mlp_forward.1']
    #allocation6 [shape = 'u8[512]{0}', space=smem, size = 0x200, scoped, tag = 'input window, operand 2, single buffered']
    #allocation7 [shape = 'u8[512]{0}', space=smem, size = 0x200, scoped, tag = 'input window, operand 3, single buffered']
    #allocation8 [shape = 's32[1]{0}', space=sflag, size = 0x4, scoped, tag = 'scoped memory for mlp_forward.1']
    #allocation9 [shape = 'u8[512]{0}', space=smem, size = 0x200, scoped, tag = 'input window, operand 4, single buffered']
    #allocation10 [shape = 'u8[512]{0}', space=smem, size = 0x200, scoped, tag = 'input window, operand 5, single buffered']
    #allocation11 [shape = 's32[1]{0}', space=sflag, size = 0x4, scoped, tag = 'scoped memory for mlp_forward.1']
    %12 = vsyncpa [#allocation3], 0
    %13 = vsyncpa [#allocation5], 0
    %14 = vsyncpa [#allocation8], 0
    %15 = vsyncpa [#allocation11], 0
    // Predicated region
    $region2: #{mlp_forward.1} parent=1 // pred_check
      _
    $region3: #{mlp_forward.1} parent=1 // pred_check_branch
      %17 = sbr.rel (0) target = $region5
    $region4: #{mlp_forward.1} parent=1 // pred_region
      %s19 = ssub.s32 16, 16
      %20 = vsyncadd [#allocation3], %s19
      %s22 = sshll.u32 %s0, 4
      %s23 = int_to_ptr.vmem [resolvable:$true] %s22
      %25 = dma.vmem_to_smem %s23, 16, [#allocation2], [#allocation3]
    $region5: #{mlp_forward.1} parent=1 // pred_fallthru
      _
    // Predicated region
    $region6: #{mlp_forward.1} parent=1 // pred_check
      _
    $region7: #{mlp_forward.1} parent=1 // pred_check_branch
      %27 = sbr.rel (0) target = $region9
    $region8: #{mlp_forward.1} parent=1 // pred_region
      %s29 = ssub.s32 16, 16
      %30 = vsyncadd [#allocation5], %s29
      %s32 = sshll.u32 %s1, 4
      %s33 = int_to_ptr.vmem [resolvable:$true] %s32
      %35 = dma.vmem_to_smem %s33, 16, [#allocation4], [#allocation5]
    $region9: #{mlp_forward.1} parent=1 // pred_fallthru
      _
    // Predicated region
    $region10: #{mlp_forward.1} parent=1 // pred_check
      _
    $region11: #{mlp_forward.1} parent=1 // pred_check_branch
      %37 = sbr.rel (0) target = $region13
    $region12: #{mlp_forward.1} parent=1 // pred_region
      %s39 = ssub.s32 16, 16
      %40 = vsyncadd [#allocation5], %s39
      %s42 = sshll.u32 %s2, 4
      %s43 = int_to_ptr.vmem [resolvable:$true] %s42
      %45 = dma.vmem_to_smem %s43, 16, [#allocation6], [#allocation5]
    $region13: #{mlp_forward.1} parent=1 // pred_fallthru
      _
    // Predicated region
    $region14: #{mlp_forward.1} parent=1 // pred_check
      _
    $region15: #{mlp_forward.1} parent=1 // pred_check_branch
      %47 = sbr.rel (0) target = $region17
    $region16: #{mlp_forward.1} parent=1 // pred_region
      %s49 = ssub.s32 16, 16
      %50 = vsyncadd [#allocation8], %s49
      %s52 = sshll.u32 %s3, 4
      %s53 = int_to_ptr.vmem [resolvable:$true] %s52
      %55 = dma.vmem_to_smem %s53, 16, [#allocation7], [#allocation8]
    $region17: #{mlp_forward.1} parent=1 // pred_fallthru
      _
    // Predicated region
    $region18: #{mlp_forward.1} parent=1 // pred_check
      _
    $region19: #{mlp_forward.1} parent=1 // pred_check_branch
      %57 = sbr.rel (0) target = $region21
    $region20: #{mlp_forward.1} parent=1 // pred_region
      %s59 = ssub.s32 16, 16
      %60 = vsyncadd [#allocation8], %s59
      %s62 = sshll.u32 %s4, 4
      %s63 = int_to_ptr.vmem [resolvable:$true] %s62
      %65 = dma.vmem_to_smem %s63, 16, [#allocation9], [#allocation8]
    $region21: #{mlp_forward.1} parent=1 // pred_fallthru
      _
    // Predicated region
    $region22: #{mlp_forward.1} parent=1 // pred_check
      _
    $region23: #{mlp_forward.1} parent=1 // pred_check_branch
      %67 = sbr.rel (0) target = $region25
    $region24: #{mlp_forward.1} parent=1 // pred_region
      %s69 = ssub.s32 16, 16
      %70 = vsyncadd [#allocation11], %s69
      %s72 = sshll.u32 %s5, 4
      %s73 = int_to_ptr.vmem [resolvable:$true] %s72
      %75 = dma.vmem_to_smem %s73, 16, [#allocation10], [#allocation11]
    $region25: #{mlp_forward.1} parent=1 // pred_fallthru
      _
    // Predicated region
    $region26: #{mlp_forward.1} parent=1 // pred_check
      _
    $region27: #{mlp_forward.1} parent=1 // pred_check_branch
      %77 = sbr.rel (0) target = $region29
    $region28: #{mlp_forward.1} parent=1 // pred_region
      _
    $region29: #{mlp_forward.1} parent=1 // pred_fallthru
      _
    // Predicated region
    $region30: #{mlp_forward.1} parent=1 // pred_check
      _
    $region31: #{mlp_forward.1} parent=1 // pred_check_branch
      %79 = sbr.rel (0) target = $region33
    $region32: #{mlp_forward.1} parent=1 // pred_region
      %80 = dma.done [#allocation3], 16
    $region33: #{mlp_forward.1} parent=1 // pred_fallthru
      _
    // Predicated region
    $region34: #{mlp_forward.1} parent=1 // pred_check
      _
    $region35: #{mlp_forward.1} parent=1 // pred_check_branch
      %82 = sbr.rel (0) target = $region37
    $region36: #{mlp_forward.1} parent=1 // pred_region
      %83 = dma.done [#allocation5], 16
    $region37: #{mlp_forward.1} parent=1 // pred_fallthru
      _
    // Predicated region
    $region38: #{mlp_forward.1} parent=1 // pred_check
      _
    $region39: #{mlp_forward.1} parent=1 // pred_check_branch
      %85 = sbr.rel (0) target = $region41
    $region40: #{mlp_forward.1} parent=1 // pred_region
      %86 = dma.done [#allocation5], 16
    $region41: #{mlp_forward.1} parent=1 // pred_fallthru
      _
    // Predicated region
    $region42: #{mlp_forward.1} parent=1 // pred_check
      _
    $region43: #{mlp_forward.1} parent=1 // pred_check_branch
      %88 = sbr.rel (0) target = $region45
    $region44: #{mlp_forward.1} parent=1 // pred_region
      %89 = dma.done [#allocation8], 16
    $region45: #{mlp_forward.1} parent=1 // pred_fallthru
      _
    // Predicated region
    $region46: #{mlp_forward.1} parent=1 // pred_check
      _
    $region47: #{mlp_forward.1} parent=1 // pred_check_branch
      %91 = sbr.rel (0) target = $region49
    $region48: #{mlp_forward.1} parent=1 // pred_region
      %92 = dma.done [#allocation8], 16
    $region49: #{mlp_forward.1} parent=1 // pred_fallthru
      _
    // Predicated region
    $region50: #{mlp_forward.1} parent=1 // pred_check
      _
    $region51: #{mlp_forward.1} parent=1 // pred_check_branch
      %94 = sbr.rel (0) target = $region53
    $region52: #{mlp_forward.1} parent=1 // pred_region
      %95 = dma.done [#allocation11], 16
    $region53: #{mlp_forward.1} parent=1 // pred_fallthru
      _
    %96 = sfence
    %v97 = vld [vmem:[%s6] sm:$0xff]
    %s98 = sadd.s32 0, 8
    %s99 = scalar_lea.vmem %s6, %s98
    %v100 = vld [vmem:[%s99] sm:$0xff]
    %s101 = sadd.s32 0, 16
    %s102 = scalar_lea.vmem %s6, %s101
    %v103 = vld [vmem:[%s102] sm:$0xff]
    %s104 = sld [smem:[#allocation2]]
    %v105 = vstv %s104
    %v106 = vmul.f32 %v97, %v105
    %s107 = sld [smem:[#allocation2 + $0x6]]
    %v108 = vstv %s107
    %v109 = vmul.f32 %v100, %v108
    %v110 = vadd.f32 %v106, %v109
    %s111 = sld [smem:[#allocation2 + $0xc]]
    %v112 = vstv %s111
    %v113 = vmul.f32 %v103, %v112
    %v114 = vadd.f32 %v110, %v113
    %s115 = sld [smem:[#allocation4]]
    %v116 = vstv %s115
    %v117 = vadd.f32 %v114, %v116
    %v118 = vmax.f32 %v117, 0.0
    %s119 = sld [smem:[#allocation2 + $0x1]]
    %v120 = vstv %s119
    %v121 = vmul.f32 %v97, %v120
    %s122 = sld [smem:[#allocation2 + $0x7]]
    %v123 = vstv %s122
    %v124 = vmul.f32 %v100, %v123
    %v125 = vadd.f32 %v121, %v124
    %s126 = sld [smem:[#allocation2 + $0xd]]
    %v127 = vstv %s126
    %v128 = vmul.f32 %v103, %v127
    %v129 = vadd.f32 %v125, %v128
    %s130 = sld [smem:[#allocation4 + $0x1]]
    %v131 = vstv %s130
    %v132 = vadd.f32 %v129, %v131
    %v133 = vmax.f32 %v132, 0.0
    %s134 = sld [smem:[#allocation2 + $0x2]]
    %v135 = vstv %s134
    %v136 = vmul.f32 %v97, %v135
    %s137 = sld [smem:[#allocation2 + $0x8]]
    %v138 = vstv %s137
    %v139 = vmul.f32 %v100, %v138
    %v140 = vadd.f32 %v136, %v139
    %s141 = sld [smem:[#allocation2 + $0xe]]
    %v142 = vstv %s141
    %v143 = vmul.f32 %v103, %v142
    %v144 = vadd.f32 %v140, %v143
    %s145 = sld [smem:[#allocation4 + $0x2]]
    %v146 = vstv %s145
    %v147 = vadd.f32 %v144, %v146
    %v148 = vmax.f32 %v147, 0.0
    %s149 = sld [smem:[#allocation2 + $0x3]]
    %v150 = vstv %s149
    %v151 = vmul.f32 %v97, %v150
    %s152 = sld [smem:[#allocation2 + $0x9]]
    %v153 = vstv %s152
    %v154 = vmul.f32 %v100, %v153
    %v155 = vadd.f32 %v151, %v154
    %s156 = sld [smem:[#allocation2 + $0xf]]
    %v157 = vstv %s156
    %v158 = vmul.f32 %v103, %v157
    %v159 = vadd.f32 %v155, %v158
    %s160 = sld [smem:[#allocation4 + $0x3]]
    %v161 = vstv %s160
    %v162 = vadd.f32 %v159, %v161
    %v163 = vmax.f32 %v162, 0.0
    %s164 = sld [smem:[#allocation2 + $0x4]]
    %v165 = vstv %s164
    %v166 = vmul.f32 %v97, %v165
    %s167 = sld [smem:[#allocation2 + $0xa]]
    %v168 = vstv %s167
    %v169 = vmul.f32 %v100, %v168
    %v170 = vadd.f32 %v166, %v169
    %s171 = sld [smem:[#allocation2 + $0x10]]
    %v172 = vstv %s171
    %v173 = vmul.f32 %v103, %v172
    %v174 = vadd.f32 %v170, %v173
    %s175 = sld [smem:[#allocation4 + $0x4]]
    %v176 = vstv %s175
    %v177 = vadd.f32 %v174, %v176
    %v178 = vmax.f32 %v177, 0.0
    %s179 = sld [smem:[#allocation2 + $0x5]]
    %v180 = vstv %s179
    %v181 = vmul.f32 %v97, %v180
    %s182 = sld [smem:[#allocation2 + $0xb]]
    %v183 = vstv %s182
    %v184 = vmul.f32 %v100, %v183
    %v185 = vadd.f32 %v181, %v184
    %s186 = sld [smem:[#allocation2 + $0x11]]
    %v187 = vstv %s186
    %v188 = vmul.f32 %v103, %v187
    %v189 = vadd.f32 %v185, %v188
    %s190 = sld [smem:[#allocation4 + $0x5]]
    %v191 = vstv %s190
    %v192 = vadd.f32 %v189, %v191
    %v193 = vmax.f32 %v192, 0.0
    %s194 = sld [smem:[#allocation6]]
    %v195 = vstv %s194
    %v196 = vmul.f32 %v118, %v195
    %s197 = sld [smem:[#allocation6 + $0x6]]
    %v198 = vstv %s197
    %v199 = vmul.f32 %v133, %v198
    %v200 = vadd.f32 %v196, %v199
    %s201 = sld [smem:[#allocation6 + $0xc]]
    %v202 = vstv %s201
    %v203 = vmul.f32 %v148, %v202
    %v204 = vadd.f32 %v200, %v203
    %s205 = sld [smem:[#allocation6 + $0x12]]
    %v206 = vstv %s205
    %v207 = vmul.f32 %v163, %v206
    %v208 = vadd.f32 %v204, %v207
    %s209 = sld [smem:[#allocation6 + $0x18]]
    %v210 = vstv %s209
    %v211 = vmul.f32 %v178, %v210
    %v212 = vadd.f32 %v208, %v211
    %s213 = sld [smem:[#allocation6 + $0x1e]]
    %v214 = vstv %s213
    %v215 = vmul.f32 %v193, %v214
    %v216 = vadd.f32 %v212, %v215
    %s217 = sld [smem:[#allocation7]]
    %v218 = vstv %s217
    %v219 = vadd.f32 %v216, %v218
    %v220 = vmax.f32 %v219, 0.0
    %s221 = sld [smem:[#allocation6 + $0x1]]
    %v222 = vstv %s221
    %v223 = vmul.f32 %v118, %v222
    %s224 = sld [smem:[#allocation6 + $0x7]]
    %v225 = vstv %s224
    %v226 = vmul.f32 %v133, %v225
    %v227 = vadd.f32 %v223, %v226
    %s228 = sld [smem:[#allocation6 + $0xd]]
    %v229 = vstv %s228
    %v230 = vmul.f32 %v148, %v229
    %v231 = vadd.f32 %v227, %v230
    %s232 = sld [smem:[#allocation6 + $0x13]]
    %v233 = vstv %s232
    %v234 = vmul.f32 %v163, %v233
    %v235 = vadd.f32 %v231, %v234
    %s236 = sld [smem:[#allocation6 + $0x19]]
    %v237 = vstv %s236
    %v238 = vmul.f32 %v178, %v237
    %v239 = vadd.f32 %v235, %v238
    %s240 = sld [smem:[#allocation6 + $0x1f]]
    %v241 = vstv %s240
    %v242 = vmul.f32 %v193, %v241
    %v243 = vadd.f32 %v239, %v242
    %s244 = sld [smem:[#allocation7 + $0x1]]
    %v245 = vstv %s244
    %v246 = vadd.f32 %v243, %v245
    %v247 = vmax.f32 %v246, 0.0
    %s248 = sld [smem:[#allocation6 + $0x2]]
    %v249 = vstv %s248
    %v250 = vmul.f32 %v118, %v249
    %s251 = sld [smem:[#allocation6 + $0x8]]
    %v252 = vstv %s251
    %v253 = vmul.f32 %v133, %v252
    %v254 = vadd.f32 %v250, %v253
    %s255 = sld [smem:[#allocation6 + $0xe]]
    %v256 = vstv %s255
    %v257 = vmul.f32 %v148, %v256
    %v258 = vadd.f32 %v254, %v257
    %s259 = sld [smem:[#allocation6 + $0x14]]
    %v260 = vstv %s259
    %v261 = vmul.f32 %v163, %v260
    %v262 = vadd.f32 %v258, %v261
    %s263 = sld [smem:[#allocation6 + $0x1a]]
    %v264 = vstv %s263
    %v265 = vmul.f32 %v178, %v264
    %v266 = vadd.f32 %v262, %v265
    %s267 = sld [smem:[#allocation6 + $0x20]]
    %v268 = vstv %s267
    %v269 = vmul.f32 %v193, %v268
    %v270 = vadd.f32 %v266, %v269
    %s271 = sld [smem:[#allocation7 + $0x2]]
    %v272 = vstv %s271
    %v273 = vadd.f32 %v270, %v272
    %v274 = vmax.f32 %v273, 0.0
    %s275 = sld [smem:[#allocation6 + $0x3]]
    %v276 = vstv %s275
    %v277 = vmul.f32 %v118, %v276
    %s278 = sld [smem:[#allocation6 + $0x9]]
    %v279 = vstv %s278
    %v280 = vmul.f32 %v133, %v279
    %v281 = vadd.f32 %v277, %v280
    %s282 = sld [smem:[#allocation6 + $0xf]]
    %v283 = vstv %s282
    %v284 = vmul.f32 %v148, %v283
    %v285 = vadd.f32 %v281, %v284
    %s286 = sld [smem:[#allocation6 + $0x15]]
    %v287 = vstv %s286
    %v288 = vmul.f32 %v163, %v287
    %v289 = vadd.f32 %v285, %v288
    %s290 = sld [smem:[#allocation6 + $0x1b]]
    %v291 = vstv %s290
    %v292 = vmul.f32 %v178, %v291
    %v293 = vadd.f32 %v289, %v292
    %s294 = sld [smem:[#allocation6 + $0x21]]
    %v295 = vstv %s294
    %v296 = vmul.f32 %v193, %v295
    %v297 = vadd.f32 %v293, %v296
    %s298 = sld [smem:[#allocation7 + $0x3]]
    %v299 = vstv %s298
    %v300 = vadd.f32 %v297, %v299
    %v301 = vmax.f32 %v300, 0.0
    %s302 = sld [smem:[#allocation6 + $0x4]]
    %v303 = vstv %s302
    %v304 = vmul.f32 %v118, %v303
    %s305 = sld [smem:[#allocation6 + $0xa]]
    %v306 = vstv %s305
    %v307 = vmul.f32 %v133, %v306
    %v308 = vadd.f32 %v304, %v307
    %s309 = sld [smem:[#allocation6 + $0x10]]
    %v310 = vstv %s309
    %v311 = vmul.f32 %v148, %v310
    %v312 = vadd.f32 %v308, %v311
    %s313 = sld [smem:[#allocation6 + $0x16]]
    %v314 = vstv %s313
    %v315 = vmul.f32 %v163, %v314
    %v316 = vadd.f32 %v312, %v315
    %s317 = sld [smem:[#allocation6 + $0x1c]]
    %v318 = vstv %s317
    %v319 = vmul.f32 %v178, %v318
    %v320 = vadd.f32 %v316, %v319
    %s321 = sld [smem:[#allocation6 + $0x22]]
    %v322 = vstv %s321
    %v323 = vmul.f32 %v193, %v322
    %v324 = vadd.f32 %v320, %v323
    %s325 = sld [smem:[#allocation7 + $0x4]]
    %v326 = vstv %s325
    %v327 = vadd.f32 %v324, %v326
    %v328 = vmax.f32 %v327, 0.0
    %s329 = sld [smem:[#allocation6 + $0x5]]
    %v330 = vstv %s329
    %v331 = vmul.f32 %v118, %v330
    %s332 = sld [smem:[#allocation6 + $0xb]]
    %v333 = vstv %s332
    %v334 = vmul.f32 %v133, %v333
    %v335 = vadd.f32 %v331, %v334
    %s336 = sld [smem:[#allocation6 + $0x11]]
    %v337 = vstv %s336
    %v338 = vmul.f32 %v148, %v337
    %v339 = vadd.f32 %v335, %v338
    %s340 = sld [smem:[#allocation6 + $0x17]]
    %v341 = vstv %s340
    %v342 = vmul.f32 %v163, %v341
    %v343 = vadd.f32 %v339, %v342
    %s344 = sld [smem:[#allocation6 + $0x1d]]
    %v345 = vstv %s344
    %v346 = vmul.f32 %v178, %v345
    %v347 = vadd.f32 %v343, %v346
    %s348 = sld [smem:[#allocation6 + $0x23]]
    %v349 = vstv %s348
    %v350 = vmul.f32 %v193, %v349
    %v351 = vadd.f32 %v347, %v350
    %s352 = sld [smem:[#allocation7 + $0x5]]
    %v353 = vstv %s352
    %v354 = vadd.f32 %v351, %v353
    %v355 = vmax.f32 %v354, 0.0
    %s356 = sld [smem:[#allocation9]]
    %v357 = vstv %s356
    %v358 = vmul.f32 %v220, %v357
    %s359 = sld [smem:[#allocation9 + $0x2]]
    %v360 = vstv %s359
    %v361 = vmul.f32 %v247, %v360
    %v362 = vadd.f32 %v358, %v361
    %s363 = sld [smem:[#allocation9 + $0x4]]
    %v364 = vstv %s363
    %v365 = vmul.f32 %v274, %v364
    %v366 = vadd.f32 %v362, %v365
    %s367 = sld [smem:[#allocation9 + $0x6]]
    %v368 = vstv %s367
    %v369 = vmul.f32 %v301, %v368
    %v370 = vadd.f32 %v366, %v369
    %s371 = sld [smem:[#allocation9 + $0x8]]
    %v372 = vstv %s371
    %v373 = vmul.f32 %v328, %v372
    %v374 = vadd.f32 %v370, %v373
    %s375 = sld [smem:[#allocation9 + $0xa]]
    %v376 = vstv %s375
    %v377 = vmul.f32 %v355, %v376
    %v378 = vadd.f32 %v374, %v377
    %s379 = sld [smem:[#allocation10]]
    %v380 = vstv %s379
    %v381 = vadd.f32 %v378, %v380
    %s382 = sld [smem:[#allocation9 + $0x1]]
    %v383 = vstv %s382
    %v384 = vmul.f32 %v220, %v383
    %s385 = sld [smem:[#allocation9 + $0x3]]
    %v386 = vstv %s385
    %v387 = vmul.f32 %v247, %v386
    %v388 = vadd.f32 %v384, %v387
    %s389 = sld [smem:[#allocation9 + $0x5]]
    %v390 = vstv %s389
    %v391 = vmul.f32 %v274, %v390
    %v392 = vadd.f32 %v388, %v391
    %s393 = sld [smem:[#allocation9 + $0x7]]
    %v394 = vstv %s393
    %v395 = vmul.f32 %v301, %v394
    %v396 = vadd.f32 %v392, %v395
    %s397 = sld [smem:[#allocation9 + $0x9]]
    %v398 = vstv %s397
    %v399 = vmul.f32 %v328, %v398
    %v400 = vadd.f32 %v396, %v399
    %s401 = sld [smem:[#allocation9 + $0xb]]
    %v402 = vstv %s401
    %v403 = vmul.f32 %v355, %v402
    %v404 = vadd.f32 %v400, %v403
    %s405 = sld [smem:[#allocation10 + $0x1]]
    %v406 = vstv %s405
    %v407 = vadd.f32 %v404, %v406
    %v408 = vsub.f32 %v407, %v381
    %v409 = vmul.f32 %v408, 1.442695
    %v410 = vpow.pop %v409
    %v411 = vadd.f32 %v410, 1.0
    %v412 = vrcp.pop %v411
    %v413 = vmul.f32 1.0, %v412
    %v414 = vsub.f32 1.0, %v413
    %415 = vst [vmem:[%s7] sm:$0xff] %v413
    %s416 = scalar_lea.vmem %s7, %s98
    %417 = vst [vmem:[%s416] sm:$0xff] %v414
    // Predicated region
    $region54: #{mlp_forward.1} parent=1 // pred_check
      _
    $region55: #{mlp_forward.1} parent=1 // pred_check_branch
      %419 = sbr.rel (0) target = $region57
    $region56: #{mlp_forward.1} parent=1 // pred_region
      _
    $region57: #{mlp_forward.1} parent=1 // pred_fallthru
      _
    // Predicated region
    $region58: #{mlp_forward.1} parent=1 // pred_check
      _
    $region59: #{mlp_forward.1} parent=1 // pred_check_branch
      %421 = sbr.rel (0) target = $region61
    $region60: #{mlp_forward.1} parent=1 // pred_region
      _
    $region61: #{mlp_forward.1} parent=1 // pred_fallthru
      _
    %422 = vsyncpa [#allocation3], 1
    %423 = vsyncpa [#allocation5], 1
    %424 = vsyncpa [#allocation8], 1
    %425 = vsyncpa [#allocation11], 1

</llo_original>
